<compile_context>
chip_gen: v7x
topology: tpu7x:2x2x1
jax: 0.10.0
libtpu: 0.0.40
codegen_flags: <defaults>
</compile_context>

<pallas_src>
import functools

import jax
import jax.numpy as jnp
from jax.experimental import pallas as pl
from jax.experimental.pallas import tpu as pltpu

BN_EPS = 1e-5          # nn.BatchNorm1d default (the class attr eps=1e-6 is unused by BN)
LANE = 128
MXU_DTYPE = jnp.bfloat16   # MXU operand dtype (f32 accumulation); set jnp.float32 to disable


def _rup(x, m):
    return ((x + m - 1) // m) * m


def _pad2(a, rows, cols):
    out = jnp.zeros((rows, cols), a.dtype)
    return out.at[:a.shape[0], :a.shape[1]].set(a)


def _fold_bn(g, b, rm, rv, width):
    scale = g / jnp.sqrt(rv + BN_EPS)
    shift = b - rm * scale
    return (_pad2(scale.reshape(1, -1), 1, width),
            _pad2(shift.reshape(1, -1), 1, width))


# ---------------- stage 1: node-level message precursor ----------------
#   m_node = relu(bn_msg(relu(bn_in(x)) @ W1 + b1))
# (linear1/BN/relu are per-row, so they commute with the edge gather.)
def _node_message_kernel(x_ref, in_s_ref, in_b_ref, w1_ref, b1_ref,
                         msg_s_ref, msg_b_ref, m_ref):
    li = jnp.maximum(x_ref[...] * in_s_ref[...] + in_b_ref[...], 0.0)
    m = jnp.dot(li.astype(MXU_DTYPE), w1_ref[...],
                preferred_element_type=jnp.float32) + b1_ref[...]
    m_ref[...] = jnp.maximum(m * msg_s_ref[...] + msg_b_ref[...], 0.0)


# ---------------- stage 2: edge stage ----------------
# Per edge tile: gather node messages, run the edge-kernel MLP in lane-dense
# slabs, do the per-edge mat-vec with full-width FMAs, scatter-add into a
# per-node VMEM accumulator (output written back once at the last tile).
def _edge_scatter_kernel(h, te,
                         node_in_ref, node_out_ref,          # SMEM (scalar prefetch)
                         mnode_ref,                          # (NP, 1, HP) f32 (resident)
                         ef_ref, ew_ref,                     # (te, EINP) bf16, (te, 1) f32
                         wk1_ref, bk1_ref,                   # (EINP, KHP) bf16, (1, KHP) f32
                         wk2_ref, bk2_ref,                   # (h+1, KHP, HP) bf16, (h+1, 1, HP) f32
                         upd_ref,                            # out: (NP, 1, HP) f32
                         acc_ref, m_scr, msg_scr):           # scratch
    i = pl.program_id(0)

    @pl.when(i == 0)
    def _():
        acc_ref[...] = jnp.zeros_like(acc_ref)

    base = i * te

    # --- gather: per-edge node-message rows -> m_scr [te, HP] (O(E*H), no one-hot) ---
    for e in range(te):
        m_scr[e:e + 1, :] = mnode_ref[node_in_ref[base + e]]

    # --- edge kernel MLP (lane-dense slabs) ---
    kh = jnp.dot(ef_ref[...], wk1_ref[...],
                 preferred_element_type=jnp.float32) + bk1_ref[...]
    kh = jnp.maximum(kh, 0.0).astype(MXU_DTYPE)

    # --- per-edge mat-vec, all 128-lane-aligned:
    #   msg[e, j] = kfull[e, j] + sum_k m[e, k] * kfull[e, (j+1)*H + k]
    # slab 0 lane j    == kfull[:, j]
    # slab k+1 lane j  == kfull[:, (j+1)*H + k]        (built in the wrapper)
    m_edge = m_scr[...]
    msg = jnp.dot(kh, wk2_ref[0], preferred_element_type=jnp.float32) + bk2_ref[0]
    for k in range(h):
        slab = (jnp.dot(kh, wk2_ref[k + 1], preferred_element_type=jnp.float32)
                + bk2_ref[k + 1])
        msg = msg + m_edge[:, k:k + 1] * slab
    msg_scr[...] = msg * ew_ref[...]          # fold edge_weight, one lane-dense store

    # --- scatter-add into the per-node accumulator (O(E*H)) ---
    for e in range(te):
        dst = node_out_ref[base + e]
        acc_ref[dst] = acc_ref[dst] + msg_scr[e:e + 1, :]

    @pl.when(i == pl.num_programs(0) - 1)
    def _():
        upd_ref[...] = acc_ref[...]


# ---------------- stage 3: node-level combine ----------------
#   out = bn_out(relu(bn_upd(update)) @ W2 + b2)
def _node_update_kernel(u_ref, upd_s_ref, upd_b_ref, w2_ref, b2_ref,
                        out_s_ref, out_b_ref, o_ref):
    u = jnp.maximum(u_ref[...] * upd_s_ref[...] + upd_b_ref[...], 0.0)
    o = jnp.dot(u.astype(MXU_DTYPE), w2_ref[...],
                preferred_element_type=jnp.float32) + b2_ref[...]
    o_ref[...] = o * out_s_ref[...] + out_b_ref[...]


def ieconv_forward(x, edge_feat, edge_list, edge_weight, params, *,
                   node_tile=128, edge_tile=128):
    N, Din = x.shape
    E, Ein = edge_feat.shape
    H = params["w1"].shape[1]
    KH = params["wk1"].shape[1]
    Dout = params["w2"].shape[1]
    f32 = jnp.float32

    DP, HP = _rup(Din, LANE), _rup(H, LANE)
    EINP, KHP, DOUTP = _rup(Ein, LANE), _rup(KH, LANE), _rup(Dout, LANE)
    NP, EP = _rup(N, node_tile), _rup(E, edge_tile)

    # ---- fold BN + pad parameters (zero padding keeps padded lanes exactly 0) ----
    in_s, in_b = _fold_bn(*params["bn_in"], DP)
    msg_s, msg_b = _fold_bn(*params["bn_msg"], HP)
    upd_s, upd_b = _fold_bn(*params["bn_upd"], HP)
    out_s, out_b = _fold_bn(*params["bn_out"], DOUTP)

    w1p = _pad2(params["w1"], DP, HP).astype(MXU_DTYPE)
    b1p = _pad2(params["b1"].reshape(1, -1), 1, HP).astype(f32)
    wk1p = _pad2(params["wk1"], EINP, KHP).astype(MXU_DTYPE)
    bk1p = _pad2(params["bk1"].reshape(1, -1), 1, KHP).astype(f32)
    w2p = _pad2(params["w2"], HP, DOUTP).astype(MXU_DTYPE)
    b2p = _pad2(params["b2"].reshape(1, -1), 1, DOUTP).astype(f32)

    # Rearranged "fat" kernel-MLP output weight: (H+1) lane-dense slabs of shape
    # (KHP, HP):  slab 0 lane j <- wk2[:, j];  slab k+1 lane j <- wk2[:, (j+1)*H + k].
    wk2, bk2 = params["wk2"], params["bk2"]
    wk2_3 = wk2.T.reshape(H + 1, H, KH)                  # [r, c, q] = wk2[q, r*H + c]
    wk2f = jnp.zeros((H + 1, KHP, HP), f32)
    wk2f = wk2f.at[0, :KH, :H].set(jnp.transpose(wk2_3[0], (1, 0)))
    wk2f = wk2f.at[1:, :KH, :H].set(jnp.transpose(wk2_3[1:], (1, 2, 0)))
    wk2f = wk2f.astype(MXU_DTYPE)
    bk2_3 = bk2.reshape(H + 1, H)
    bk2f = jnp.zeros((H + 1, 1, HP), f32)
    bk2f = bk2f.at[0, 0, :H].set(bk2_3[0])
    bk2f = bk2f.at[1:, 0, :H].set(bk2_3[1:].T)

    # ---- pad activations / graph arrays ----
    xp = _pad2(x.astype(f32), NP, DP)
    efp = _pad2(edge_feat.astype(f32), EP, EINP).astype(MXU_DTYPE)
    ewp = jnp.zeros((EP, 1), f32).at[:E, 0].set(edge_weight.astype(f32))  # padded edges: weight 0
    node_in = jnp.zeros((EP,), jnp.int32).at[:E].set(edge_list[:, 0].astype(jnp.int32))
    node_out = jnp.zeros((EP,), jnp.int32).at[:E].set(edge_list[:, 1].astype(jnp.int32))

    cp_par = pltpu.CompilerParams(dimension_semantics=("parallel",),
                                  vmem_limit_bytes=64 * 1024 * 1024)
    cp_red = pltpu.CompilerParams(dimension_semantics=("arbitrary",),
                                  vmem_limit_bytes=64 * 1024 * 1024)
    full = lambda i: (0, 0)

    # ---- stage 1: node messages (node-tiled, parallel) ----
    m_node = pl.pallas_call(
        _node_message_kernel,
        out_shape=jax.ShapeDtypeStruct((NP, HP), f32),
        grid_spec=pltpu.PrefetchScalarGridSpec(
            num_scalar_prefetch=0, grid=(NP // node_tile,),
            in_specs=[pl.BlockSpec((node_tile, DP), lambda i: (i, 0)),
                      pl.BlockSpec((1, DP), full),
                      pl.BlockSpec((1, DP), full),
                      pl.BlockSpec((DP, HP), full),
                      pl.BlockSpec((1, HP), full),
                      pl.BlockSpec((1, HP), full),
                      pl.BlockSpec((1, HP), full)],
            out_specs=pl.BlockSpec((node_tile, HP), lambda i: (i, 0))),
        compiler_params=cp_par,
    )(xp, in_s, in_b, w1p, b1p, msg_s, msg_b)

    # one (1, HP) row-tile per node -> safe dynamic row indexing inside the edge kernel
    m_node3 = m_node.reshape(NP, 1, HP)

    # ---- stage 2: edge stage (edge-tiled reduction into a node accumulator) ----
    # TODO(synk): for N too large for a VMEM-resident accumulator, bucket edges by
    # destination node-tile and add a node-tile grid axis.
    full3 = lambda i, ni, no: (0, 0, 0)
    full2 = lambda i, ni, no: (0, 0)
    edge2 = lambda i, ni, no: (i, 0)
    upd3 = pl.pallas_call(
        functools.partial(_edge_scatter_kernel, H, edge_tile),
        out_shape=jax.ShapeDtypeStruct((NP, 1, HP), f32),
        grid_spec=pltpu.PrefetchScalarGridSpec(
            num_scalar_prefetch=2, grid=(EP // edge_tile,),
            in_specs=[pl.BlockSpec((NP, 1, HP), full3),          # m_node3 (resident)
                      pl.BlockSpec((edge_tile, EINP), edge2),    # edge_feat tile
                      pl.BlockSpec((edge_tile, 1), edge2),       # edge_weight tile
                      pl.BlockSpec((EINP, KHP), full2),          # wk1
                      pl.BlockSpec((1, KHP), full2),             # bk1
                      pl.BlockSpec((H + 1, KHP, HP), full3),     # wk2 slabs
                      pl.BlockSpec((H + 1, 1, HP), full3)],      # bk2 slabs
            out_specs=pl.BlockSpec((NP, 1, HP), full3),
            scratch_shapes=[pltpu.VMEM((NP, 1, HP), f32),        # node accumulator
                            pltpu.VMEM((edge_tile, HP), f32),    # gathered messages
                            pltpu.VMEM((edge_tile, HP), f32)]),  # weighted edge messages
        compiler_params=cp_red,
    )(node_in, node_out, m_node3, efp, ewp, wk1p, bk1p, wk2f, bk2f)

    update = upd3.reshape(NP, HP)

    # ---- stage 3: combine (node-tiled, parallel) ----
    out_pad = pl.pallas_call(
        _node_update_kernel,
        out_shape=jax.ShapeDtypeStruct((NP, DOUTP), f32),
        grid_spec=pltpu.PrefetchScalarGridSpec(
            num_scalar_prefetch=0, grid=(NP // node_tile,),
            in_specs=[pl.BlockSpec((node_tile, HP), lambda i: (i, 0)),
                      pl.BlockSpec((1, HP), full),
                      pl.BlockSpec((1, HP), full),
                      pl.BlockSpec((HP, DOUTP), full),
                      pl.BlockSpec((1, DOUTP), full),
                      pl.BlockSpec((1, DOUTP), full),
                      pl.BlockSpec((1, DOUTP), full)],
            out_specs=pl.BlockSpec((node_tile, DOUTP), lambda i: (i, 0))),
        compiler_params=cp_par,
    )(update, upd_s, upd_b, w2p, b2p, out_s, out_b)

    return out_pad[:N, :Dout]


# ---------------- pure-JAX reference (independent check, f32) ----------------

def ieconv_ref(x, edge_feat, edge_list, edge_weight, params):
    def bn(v, p):
        g, b, rm, rv = p
        return (v - rm) / jnp.sqrt(rv + BN_EPS) * g + b

    N = x.shape[0]
    H = params["w1"].shape[1]
    node_in, node_out = edge_list[:, 0], edge_list[:, 1]

    layer_input = jax.nn.relu(bn(x, params["bn_in"]))
    m = layer_input[node_in] @ params["w1"] + params["b1"]
    m = jax.nn.relu(bn(m, params["bn_msg"]))
    kh = jax.nn.relu(edge_feat @ params["wk1"] + params["bk1"])
    kfull = kh @ params["wk2"] + params["bk2"]
    kmat = kfull.reshape(-1, H + 1, H)
    msg = jnp.einsum("ijk,ik->ij", kmat[:, 1:, :], m) + kmat[:, 0, :]
    upd = jax.ops.segment_sum(msg * edge_weight[:, None], node_out, num_segments=N)
    upd = jax.nn.relu(bn(upd, params["bn_upd"]))
    out = upd @ params["w2"] + params["b2"]
    return bn(out, params["bn_out"])


# ---------------- deterministic parameter init ----------------

def init_params(key, Din, H, Dout, Ein, KH):
    ks = jax.random.split(key, 8)

    def lin(k, fan_in, fan_out):
        k1, k2 = jax.random.split(k)
        bound = 1.0 / jnp.sqrt(fan_in)
        w = jax.random.uniform(k1, (fan_in, fan_out), minval=-bound, maxval=bound,
                               dtype=jnp.float32)
        b = jax.random.uniform(k2, (fan_out,), minval=-bound, maxval=bound,
                               dtype=jnp.float32)
        return w, b

    def bn(k, c):
        k1, k2, k3, k4 = jax.random.split(k, 4)
        g = jax.random.uniform(k1, (c,), minval=0.5, maxval=1.5, dtype=jnp.float32)
        b = 0.1 * jax.random.normal(k2, (c,), dtype=jnp.float32)
        rm = 0.1 * jax.random.normal(k3, (c,), dtype=jnp.float32)
        rv = jax.random.uniform(k4, (c,), minval=0.5, maxval=1.5, dtype=jnp.float32)
        return (g, b, rm, rv)

    w1, b1 = lin(ks[0], Din, H)
    wk1, bk1 = lin(ks[1], Ein, KH)
    wk2, bk2 = lin(ks[2], KH, (H + 1) * H)
    w2, b2 = lin(ks[3], H, Dout)
    return dict(
        w1=w1, b1=b1, wk1=wk1, bk1=bk1, wk2=wk2, bk2=bk2, w2=w2, b2=b2,
        bn_in=bn(ks[4], Din), bn_msg=bn(ks[5], H),
        bn_upd=bn(ks[6], H), bn_out=bn(ks[7], Dout),
    )


if __name__ == "__main__":
    # small synthetic graph
    N, E = 16, 32                       # nodes, edges
    Din, H, Dout = 16, 8, 16            # input_dim, hidden_dim, output_dim
    Ein, KH = 12, 32                    # edge_input_dim, kernel_hidden_dim

    key = jax.random.PRNGKey(0)
    kx, ke, kel, kew, kp = jax.random.split(key, 5)
    x = jax.random.normal(kx, (N, Din), dtype=jnp.float32)
    edge_feat = jax.random.normal(ke, (E, Ein), dtype=jnp.float32)
    edge_list = jax.random.randint(kel, (E, 2), 0, N)          # [:,0]=in, [:,1]=out
    edge_weight = jax.random.uniform(kew, (E,), minval=0.5, maxval=1.5,
                                     dtype=jnp.float32)
    params = init_params(kp, Din, H, Dout, Ein, KH)

    out = ieconv_forward(x, edge_feat, edge_list, edge_weight, params)
    out = jax.block_until_ready(out)

    ref = ieconv_ref(x, edge_feat, edge_list, edge_weight, params)
    assert out.shape == (N, Dout)
    # tolerance accounts for bf16 MXU operands (f32 accumulation / reference is f32)
    max_err = float(jnp.max(jnp.abs(out - ref)))
    assert jnp.allclose(out, ref, rtol=5e-2, atol=5e-2), f"mismatch vs reference (max abs err {max_err})"
    print("KERNEL_OK")
</pallas_src>

<mosaic_0001>
module attributes {stable_mosaic.version = 11 : i64} {
  func.func @_node_message_kernel(%arg0: i32, %arg1: memref<128x128xf32, #tpu.memory_space<vmem>>, %arg2: memref<1x128xf32, #tpu.memory_space<vmem>>, %arg3: memref<1x128xf32, #tpu.memory_space<vmem>>, %arg4: memref<128x128xbf16, #tpu.memory_space<vmem>>, %arg5: memref<1x128xf32, #tpu.memory_space<vmem>>, %arg6: memref<1x128xf32, #tpu.memory_space<vmem>>, %arg7: memref<1x128xf32, #tpu.memory_space<vmem>>, %arg8: memref<128x128xf32, #tpu.memory_space<vmem>>) attributes {dimension_semantics = [#tpu.dimension_semantics<parallel>], iteration_bounds = array<i64: 1>, scalar_prefetch = 0 : i64, scratch_operands = 0 : i64, tpu.core_type = #tpu.core_type<tc>, window_params = [{transform_indices = @transform_0, window_bounds = array<i64: 128, 128>}, {pipeline_mode = #tpu.pipeline_mode<synchronous>, transform_indices = @transform_1, window_bounds = array<i64: 1, 128>}, {pipeline_mode = #tpu.pipeline_mode<synchronous>, transform_indices = @transform_2, window_bounds = array<i64: 1, 128>}, {pipeline_mode = #tpu.pipeline_mode<synchronous>, transform_indices = @transform_3, window_bounds = array<i64: 128, 128>}, {pipeline_mode = #tpu.pipeline_mode<synchronous>, transform_indices = @transform_4, window_bounds = array<i64: 1, 128>}, {pipeline_mode = #tpu.pipeline_mode<synchronous>, transform_indices = @transform_5, window_bounds = array<i64: 1, 128>}, {pipeline_mode = #tpu.pipeline_mode<synchronous>, transform_indices = @transform_6, window_bounds = array<i64: 1, 128>}, {transform_indices = @transform_7, window_bounds = array<i64: 128, 128>}]} {
    %c0 = arith.constant 0 : index
    %c0_0 = arith.constant 0 : index
    %0 = vector.load %arg1[%c0, %c0_0] : memref<128x128xf32, #tpu.memory_space<vmem>>, vector<128x128xf32>
    %c0_1 = arith.constant 0 : index
    %c0_2 = arith.constant 0 : index
    %1 = vector.load %arg2[%c0_1, %c0_2] : memref<1x128xf32, #tpu.memory_space<vmem>>, vector<1x128xf32>
    %2 = vector.broadcast %1 : vector<1x128xf32> to vector<128x128xf32>
    %3 = arith.mulf %0, %2 : vector<128x128xf32>
    %c0_3 = arith.constant 0 : index
    %c0_4 = arith.constant 0 : index
    %4 = vector.load %arg3[%c0_3, %c0_4] : memref<1x128xf32, #tpu.memory_space<vmem>>, vector<1x128xf32>
    %5 = vector.broadcast %4 : vector<1x128xf32> to vector<128x128xf32>
    %6 = arith.addf %3, %5 : vector<128x128xf32>
    %cst = arith.constant 0.000000e+00 : f32
    %7 = vector.broadcast %cst : f32 to vector<128x128xf32>
    %8 = arith.maximumf %6, %7 : vector<128x128xf32>
    %9 = arith.truncf %8 : vector<128x128xf32> to vector<128x128xbf16>
    %c0_5 = arith.constant 0 : index
    %c0_6 = arith.constant 0 : index
    %10 = vector.load %arg4[%c0_5, %c0_6] : memref<128x128xbf16, #tpu.memory_space<vmem>>, vector<128x128xbf16>
    %cst_7 = arith.constant dense<0.000000e+00> : vector<128x128xf32>
    %11 = tpu.matmul %9, %10, %cst_7 {dimension_numbers = #tpu.dot_dimension_numbers<[1], [0], [0], [1], [0, 0, 1, 1], [], []>} : vector<128x128xbf16>, vector<128x128xbf16>, vector<128x128xf32> -> vector<128x128xf32>
    %c0_8 = arith.constant 0 : index
    %c0_9 = arith.constant 0 : index
    %12 = vector.load %arg5[%c0_8, %c0_9] : memref<1x128xf32, #tpu.memory_space<vmem>>, vector<1x128xf32>
    %13 = vector.broadcast %12 : vector<1x128xf32> to vector<128x128xf32>
    %14 = arith.addf %11, %13 : vector<128x128xf32>
    %c0_10 = arith.constant 0 : index
    %c0_11 = arith.constant 0 : index
    %15 = vector.load %arg6[%c0_10, %c0_11] : memref<1x128xf32, #tpu.memory_space<vmem>>, vector<1x128xf32>
    %16 = vector.broadcast %15 : vector<1x128xf32> to vector<128x128xf32>
    %17 = arith.mulf %14, %16 : vector<128x128xf32>
    %c0_12 = arith.constant 0 : index
    %c0_13 = arith.constant 0 : index
    %18 = vector.load %arg7[%c0_12, %c0_13] : memref<1x128xf32, #tpu.memory_space<vmem>>, vector<1x128xf32>
    %19 = vector.broadcast %18 : vector<1x128xf32> to vector<128x128xf32>
    %20 = arith.addf %17, %19 : vector<128x128xf32>
    %cst_14 = arith.constant 0.000000e+00 : f32
    %21 = vector.broadcast %cst_14 : f32 to vector<128x128xf32>
    %22 = arith.maximumf %20, %21 : vector<128x128xf32>
    %c0_15 = arith.constant 0 : index
    %c0_16 = arith.constant 0 : index
    %23 = vector.load %arg8[%c0_15, %c0_16] : memref<128x128xf32, #tpu.memory_space<vmem>>, vector<128x128xf32>
    tpu.vector_store %arg8[%c0_15, %c0_16], %22 {strides = array<i32>} : memref<128x128xf32, #tpu.memory_space<vmem>>, vector<128x128xf32>,
    return
  }
  func.func @transform_0(%arg0: i32) -> (i32, i32) {
    %c0_i32 = arith.constant 0 : i32
    %c0_i32_0 = arith.constant 0 : i32
    return %arg0, %c0_i32 : i32, i32
  }
  func.func @transform_1(%arg0: i32) -> (i32, i32) {
    %c0_i32 = arith.constant 0 : i32
    %c0_i32_0 = arith.constant 0 : i32
    %c0_i32_1 = arith.constant 0 : i32
    return %c0_i32, %c0_i32_0 : i32, i32
  }
  func.func @transform_2(%arg0: i32) -> (i32, i32) {
    %c0_i32 = arith.constant 0 : i32
    %c0_i32_0 = arith.constant 0 : i32
    %c0_i32_1 = arith.constant 0 : i32
    return %c0_i32, %c0_i32_0 : i32, i32
  }
  func.func @transform_3(%arg0: i32) -> (i32, i32) {
    %c0_i32 = arith.constant 0 : i32
    %c0_i32_0 = arith.constant 0 : i32
    %c0_i32_1 = arith.constant 0 : i32
    return %c0_i32, %c0_i32_0 : i32, i32
  }
  func.func @transform_4(%arg0: i32) -> (i32, i32) {
    %c0_i32 = arith.constant 0 : i32
    %c0_i32_0 = arith.constant 0 : i32
    %c0_i32_1 = arith.constant 0 : i32
    return %c0_i32, %c0_i32_0 : i32, i32
  }
  func.func @transform_5(%arg0: i32) -> (i32, i32) {
    %c0_i32 = arith.constant 0 : i32
    %c0_i32_0 = arith.constant 0 : i32
    %c0_i32_1 = arith.constant 0 : i32
    return %c0_i32, %c0_i32_0 : i32, i32
  }
  func.func @transform_6(%arg0: i32) -> (i32, i32) {
    %c0_i32 = arith.constant 0 : i32
    %c0_i32_0 = arith.constant 0 : i32
    %c0_i32_1 = arith.constant 0 : i32
    return %c0_i32, %c0_i32_0 : i32, i32
  }
  func.func @transform_7(%arg0: i32) -> (i32, i32) {
    %c0_i32 = arith.constant 0 : i32
    %c0_i32_0 = arith.constant 0 : i32
    return %arg0, %c0_i32 : i32, i32
  }
}

</mosaic_0001>

<llo_original>
// kernel: tpu_custom_call.1
$region0: #{tpu_custom_call.1}
  #allocation0 [shape = 'u32[]', space=smem, size = 0x4, offset = 0x4, fixed_abs, tag = 'smem constant byte address 0x4 - core index']
  #allocation1 [shape = 'u32[144,128]{1,0:T(1,128)}', space=vmem, size = 0x12000, scoped, tag = 'internal scratch']
  %s0 = inlined_call_operand.hbm [shape: f32[128,128], index: 0, kind: input, shape index: {}]
  %s1 = inlined_call_operand.hbm [shape: f32[1,128], index: 1, kind: input, shape index: {}]
  %s2 = inlined_call_operand.hbm [shape: f32[1,128], index: 2, kind: input, shape index: {}]
  %s3 = inlined_call_operand.hbm [shape: bf16[128,128], index: 3, kind: input, shape index: {}]
  %s4 = inlined_call_operand.hbm [shape: f32[1,128], index: 4, kind: input, shape index: {}]
  %s5 = inlined_call_operand.hbm [shape: f32[1,128], index: 5, kind: input, shape index: {}]
  %s6 = inlined_call_operand.hbm [shape: f32[1,128], index: 6, kind: input, shape index: {}]
  %s7 = inlined_call_operand.hbm [shape: f32[128,128], index: 7, kind: output, shape index: {}]
  %s8 = sld [smem:[#allocation0]]
  $region66: #{tpu_custom_call.1} parent=0
    _
  %s10 = ssub.s32 1, %s8
  %s11 = scalar_select 0, %s10, %s8
  $region1: #{tpu_custom_call.1} parent=0
    #allocation2 [shape = 'u8[65536]{0}', space=vmem, size = 0x10000, scoped, tag = 'input window, operand 0, single buffered']
    #allocation3 [shape = 's32[1]{0}', space=sflag, size = 0x4, scoped, tag = 'scoped memory for tpu_custom_call.1']
    #allocation4 [shape = 's32[1]{0}', space=sflag, size = 0x4, scoped, tag = 'scoped memory for tpu_custom_call.1']
    #allocation5 [shape = 'u8[512]{0}', space=vmem, size = 0x400, scoped, tag = 'input window, operand 1, single buffered']
    #allocation6 [shape = 's32[1]{0}', space=sflag, size = 0x4, scoped, tag = 'scoped memory for tpu_custom_call.1']
    #allocation7 [shape = 'u8[512]{0}', space=vmem, size = 0x400, scoped, tag = 'input window, operand 2, single buffered']
    #allocation8 [shape = 'u8[32768]{0}', space=vmem, size = 0x8000, scoped, tag = 'input window, operand 3, single buffered']
    #allocation9 [shape = 's32[1]{0}', space=sflag, size = 0x4, scoped, tag = 'scoped memory for tpu_custom_call.1']
    #allocation10 [shape = 'u8[512]{0}', space=vmem, size = 0x400, scoped, tag = 'input window, operand 4, single buffered']
    #allocation11 [shape = 'u8[512]{0}', space=vmem, size = 0x400, scoped, tag = 'input window, operand 5, single buffered']
    #allocation12 [shape = 's32[1]{0}', space=sflag, size = 0x4, scoped, tag = 'scoped memory for tpu_custom_call.1']
    #allocation13 [shape = 'u8[512]{0}', space=vmem, size = 0x400, scoped, tag = 'input window, operand 6, single buffered']
    #allocation14 [shape = 'u8[65536]{0}', space=vmem, size = 0x10000, scoped, tag = 'output window, operand 0, single buffered']
    %12 = vsyncpa [#allocation3], 0
    %13 = vsyncpa [#allocation6], 0
    %14 = vsyncpa [#allocation9], 0
    %15 = vsyncpa [#allocation12], 0
    %16 = vsyncpa [#allocation4], 0
    // Predicated region
    $region2: #{tpu_custom_call.1} parent=1 // pred_check
      _
    $region3: #{tpu_custom_call.1} parent=1 // pred_check_branch
      %18 = sbr.rel (0) target = $region5
    $region4: #{tpu_custom_call.1} parent=1 // pred_region
      %s20 = ssub.s32 2048, 2048
      %21 = vsyncadd [#allocation3], %s20
      %s22 = sshll.u32 [#allocation2], 4
      %s23 = int_to_ptr.vmem [resolvable:$true] %s22
      %28 = dma.hbm_to_vmem [thread:$0]  %s0, 2048, %s23, [#allocation3], 128, 128, 8
    $region5: #{tpu_custom_call.1} parent=1 // pred_fallthru
      _
    // Predicated region
    $region6: #{tpu_custom_call.1} parent=1 // pred_check
      _
    $region7: #{tpu_custom_call.1} parent=1 // pred_check_branch
      %30 = sbr.rel (0) target = $region9
    $region8: #{tpu_custom_call.1} parent=1 // pred_region
      %s32 = ssub.s32 16, 16
      %33 = vsyncadd [#allocation6], %s32
      %s35 = sshll.u32 [#allocation5], 4
      %s36 = int_to_ptr.vmem [resolvable:$true] %s35
      %38 = dma.hbm_to_vmem [thread:$0]  %s1, 16, %s36, [#allocation6]
    $region9: #{tpu_custom_call.1} parent=1 // pred_fallthru
      _
    // Predicated region
    $region10: #{tpu_custom_call.1} parent=1 // pred_check
      _
    $region11: #{tpu_custom_call.1} parent=1 // pred_check_branch
      %40 = sbr.rel (0) target = $region13
    $region12: #{tpu_custom_call.1} parent=1 // pred_region
      %s42 = ssub.s32 16, 16
      %43 = vsyncadd [#allocation6], %s42
      %s45 = sshll.u32 [#allocation7], 4
      %s46 = int_to_ptr.vmem [resolvable:$true] %s45
      %48 = dma.hbm_to_vmem [thread:$0]  %s2, 16, %s46, [#allocation6]
    $region13: #{tpu_custom_call.1} parent=1 // pred_fallthru
      _
    // Predicated region
    $region14: #{tpu_custom_call.1} parent=1 // pred_check
      _
    $region15: #{tpu_custom_call.1} parent=1 // pred_check_branch
      %50 = sbr.rel (0) target = $region17
    $region16: #{tpu_custom_call.1} parent=1 // pred_region
      %s52 = ssub.s32 1024, 1024
      %53 = vsyncadd [#allocation9], %s52
      %s54 = sshll.u32 [#allocation8], 4
      %s55 = int_to_ptr.vmem [resolvable:$true] %s54
      %60 = dma.hbm_to_vmem [thread:$0]  %s3, 1024, %s55, [#allocation9], 64, 64, 4
    $region17: #{tpu_custom_call.1} parent=1 // pred_fallthru
      _
    // Predicated region
    $region18: #{tpu_custom_call.1} parent=1 // pred_check
      _
    $region19: #{tpu_custom_call.1} parent=1 // pred_check_branch
      %62 = sbr.rel (0) target = $region21
    $region20: #{tpu_custom_call.1} parent=1 // pred_region
      %s64 = ssub.s32 16, 16
      %65 = vsyncadd [#allocation9], %s64
      %s67 = sshll.u32 [#allocation10], 4
      %s68 = int_to_ptr.vmem [resolvable:$true] %s67
      %70 = dma.hbm_to_vmem [thread:$0]  %s4, 16, %s68, [#allocation9]
    $region21: #{tpu_custom_call.1} parent=1 // pred_fallthru
      _
    // Predicated region
    $region22: #{tpu_custom_call.1} parent=1 // pred_check
      _
    $region23: #{tpu_custom_call.1} parent=1 // pred_check_branch
      %72 = sbr.rel (0) target = $region25
    $region24: #{tpu_custom_call.1} parent=1 // pred_region
      %s74 = ssub.s32 16, 16
      %75 = vsyncadd [#allocation12], %s74
      %s77 = sshll.u32 [#allocation11], 4
      %s78 = int_to_ptr.vmem [resolvable:$true] %s77
      %80 = dma.hbm_to_vmem [thread:$0]  %s5, 16, %s78, [#allocation12]
    $region25: #{tpu_custom_call.1} parent=1 // pred_fallthru
      _
    // Predicated region
    $region26: #{tpu_custom_call.1} parent=1 // pred_check
      _
    $region27: #{tpu_custom_call.1} parent=1 // pred_check_branch
      %82 = sbr.rel (0) target = $region29
    $region28: #{tpu_custom_call.1} parent=1 // pred_region
      %s84 = ssub.s32 16, 16
      %85 = vsyncadd [#allocation12], %s84
      %s87 = sshll.u32 [#allocation13], 4
      %s88 = int_to_ptr.vmem [resolvable:$true] %s87
      %90 = dma.hbm_to_vmem [thread:$0]  %s6, 16, %s88, [#allocation12]
    $region29: #{tpu_custom_call.1} parent=1 // pred_fallthru
      _
    // Predicated region
    $region30: #{tpu_custom_call.1} parent=1 // pred_check
      _
    $region31: #{tpu_custom_call.1} parent=1 // pred_check_branch
      %92 = sbr.rel (0) target = $region33
    $region32: #{tpu_custom_call.1} parent=1 // pred_region
      %93 = dma.done [#allocation3], 2048
    $region33: #{tpu_custom_call.1} parent=1 // pred_fallthru
      _
    // Predicated region
    $region34: #{tpu_custom_call.1} parent=1 // pred_check
      _
    $region35: #{tpu_custom_call.1} parent=1 // pred_check_branch
      %95 = sbr.rel (0) target = $region37
    $region36: #{tpu_custom_call.1} parent=1 // pred_region
      %96 = dma.done [#allocation6], 16
    $region37: #{tpu_custom_call.1} parent=1 // pred_fallthru
      _
    // Predicated region
    $region38: #{tpu_custom_call.1} parent=1 // pred_check
      _
    $region39: #{tpu_custom_call.1} parent=1 // pred_check_branch
      %98 = sbr.rel (0) target = $region41
    $region40: #{tpu_custom_call.1} parent=1 // pred_region
      %99 = dma.done [#allocation6], 16
    $region41: #{tpu_custom_call.1} parent=1 // pred_fallthru
      _
    // Predicated region
    $region42: #{tpu_custom_call.1} parent=1 // pred_check
      _
    $region43: #{tpu_custom_call.1} parent=1 // pred_check_branch
      %101 = sbr.rel (0) target = $region45
    $region44: #{tpu_custom_call.1} parent=1 // pred_region
      %102 = dma.done [#allocation9], 1024
    $region45: #{tpu_custom_call.1} parent=1 // pred_fallthru
      _
    // Predicated region
    $region46: #{tpu_custom_call.1} parent=1 // pred_check
      _
    $region47: #{tpu_custom_call.1} parent=1 // pred_check_branch
      %104 = sbr.rel (0) target = $region49
    $region48: #{tpu_custom_call.1} parent=1 // pred_region
      %105 = dma.done [#allocation9], 16
    $region49: #{tpu_custom_call.1} parent=1 // pred_fallthru
      _
    // Predicated region
    $region50: #{tpu_custom_call.1} parent=1 // pred_check
      _
    $region51: #{tpu_custom_call.1} parent=1 // pred_check_branch
      %107 = sbr.rel (0) target = $region53
    $region52: #{tpu_custom_call.1} parent=1 // pred_region
      %108 = dma.done [#allocation12], 16
    $region53: #{tpu_custom_call.1} parent=1 // pred_fallthru
      _
    // Predicated region
    $region54: #{tpu_custom_call.1} parent=1 // pred_check
      _
    $region55: #{tpu_custom_call.1} parent=1 // pred_check_branch
      %110 = sbr.rel (0) target = $region57
    $region56: #{tpu_custom_call.1} parent=1 // pred_region
      %111 = dma.done [#allocation12], 16
    $region57: #{tpu_custom_call.1} parent=1 // pred_fallthru
      _
    %v113 = vld [vmem:[#allocation2] sm:$0xff]
    %v114 = vld [vmem:[#allocation2 + $0x8] sm:$0xff]
    %v115 = vld [vmem:[#allocation2 + $0x10] sm:$0xff]
    %v116 = vld [vmem:[#allocation2 + $0x18] sm:$0xff]
    %v117 = vld [vmem:[#allocation2 + $0x20] sm:$0xff]
    %v118 = vld [vmem:[#allocation2 + $0x28] sm:$0xff]
    %v119 = vld [vmem:[#allocation2 + $0x30] sm:$0xff]
    %v120 = vld [vmem:[#allocation2 + $0x38] sm:$0xff]
    %v121 = vld [vmem:[#allocation2 + $0x40] sm:$0xff]
    %v122 = vld [vmem:[#allocation2 + $0x48] sm:$0xff]
    %v123 = vld [vmem:[#allocation2 + $0x50] sm:$0xff]
    %v124 = vld [vmem:[#allocation2 + $0x58] sm:$0xff]
    %v125 = vld [vmem:[#allocation2 + $0x60] sm:$0xff]
    %v126 = vld [vmem:[#allocation2 + $0x68] sm:$0xff]
    %v127 = vld [vmem:[#allocation2 + $0x70] sm:$0xff]
    %v128 = vld [vmem:[#allocation2 + $0x78] sm:$0xff]
    %v129 = vld [vmem:[#allocation5] sm:$0x1]
    %v131 = vlaneseq
    %v132 = vshrl.u32 %v131, 7
    %v133 = vsub.s32 0, %v132
    %v134 = vrot.slane %v129, %v133
    %v136 = vmul.f32 %v113, %v134
    %v137 = vmul.f32 %v114, %v134
    %v138 = vmul.f32 %v115, %v134
    %v139 = vmul.f32 %v116, %v134
    %v140 = vmul.f32 %v117, %v134
    %v141 = vmul.f32 %v118, %v134
    %v142 = vmul.f32 %v119, %v134
    %v143 = vmul.f32 %v120, %v134
    %v144 = vmul.f32 %v121, %v134
    %v145 = vmul.f32 %v122, %v134
    %v146 = vmul.f32 %v123, %v134
    %v147 = vmul.f32 %v124, %v134
    %v148 = vmul.f32 %v125, %v134
    %v149 = vmul.f32 %v126, %v134
    %v150 = vmul.f32 %v127, %v134
    %v151 = vmul.f32 %v128, %v134
    %v152 = vld [vmem:[#allocation7] sm:$0x1]
    %v154 = vlaneseq
    %v155 = vshrl.u32 %v154, 7
    %v156 = vsub.s32 0, %v155
    %v157 = vrot.slane %v152, %v156
    %v159 = vadd.f32 %v136, %v157
    %v160 = vadd.f32 %v137, %v157
    %v161 = vadd.f32 %v138, %v157
    %v162 = vadd.f32 %v139, %v157
    %v163 = vadd.f32 %v140, %v157
    %v164 = vadd.f32 %v141, %v157
    %v165 = vadd.f32 %v142, %v157
    %v166 = vadd.f32 %v143, %v157
    %v167 = vadd.f32 %v144, %v157
    %v168 = vadd.f32 %v145, %v157
    %v169 = vadd.f32 %v146, %v157
    %v170 = vadd.f32 %v147, %v157
    %v171 = vadd.f32 %v148, %v157
    %v172 = vadd.f32 %v149, %v157
    %v173 = vadd.f32 %v150, %v157
    %v174 = vadd.f32 %v151, %v157
    %v175 = vmax.f32 %v159, 0.0
    %v176 = vmax.f32 %v160, 0.0
    %v177 = vmax.f32 %v161, 0.0
    %v178 = vmax.f32 %v162, 0.0
    %v179 = vmax.f32 %v163, 0.0
    %v180 = vmax.f32 %v164, 0.0
    %v181 = vmax.f32 %v165, 0.0
    %v182 = vmax.f32 %v166, 0.0
    %v183 = vmax.f32 %v167, 0.0
    %v184 = vmax.f32 %v168, 0.0
    %v185 = vmax.f32 %v169, 0.0
    %v186 = vmax.f32 %v170, 0.0
    %v187 = vmax.f32 %v171, 0.0
    %v188 = vmax.f32 %v172, 0.0
    %v189 = vmax.f32 %v173, 0.0
    %v190 = vmax.f32 %v174, 0.0
    %v191 = vpack.c.bf16 %v176, %v175
    %v192 = vpack.c.bf16 %v178, %v177
    %v193 = vpack.c.bf16 %v180, %v179
    %v194 = vpack.c.bf16 %v182, %v181
    %v195 = vpack.c.bf16 %v184, %v183
    %v196 = vpack.c.bf16 %v186, %v185
    %v197 = vpack.c.bf16 %v188, %v187
    %v198 = vpack.c.bf16 %v190, %v189
    %v199 = vld [vmem:[#allocation8] sm:$0xf]
    %v200 = vld [vmem:[#allocation8 + $0x4] sm:$0xf]
    %v201 = vld [vmem:[#allocation8 + $0x8] sm:$0xf]
    %v202 = vld [vmem:[#allocation8 + $0xc] sm:$0xf]
    %v203 = vld [vmem:[#allocation8 + $0x10] sm:$0xf]
    %v204 = vld [vmem:[#allocation8 + $0x14] sm:$0xf]
    %v205 = vld [vmem:[#allocation8 + $0x18] sm:$0xf]
    %v206 = vld [vmem:[#allocation8 + $0x1c] sm:$0xf]
    %v207 = vld [vmem:[#allocation8 + $0x20] sm:$0xf]
    %v208 = vld [vmem:[#allocation8 + $0x24] sm:$0xf]
    %v209 = vld [vmem:[#allocation8 + $0x28] sm:$0xf]
    %v210 = vld [vmem:[#allocation8 + $0x2c] sm:$0xf]
    %v211 = vld [vmem:[#allocation8 + $0x30] sm:$0xf]
    %v212 = vld [vmem:[#allocation8 + $0x34] sm:$0xf]
    %v213 = vld [vmem:[#allocation8 + $0x38] sm:$0xf]
    %v214 = vld [vmem:[#allocation8 + $0x3c] sm:$0xf]
    %v215 = vld [vmem:[#allocation10] sm:$0x1]
    %v217 = vlaneseq
    %v218 = vshrl.u32 %v217, 7
    %v219 = vsub.s32 0, %v218
    %v220 = vrot.slane %v215, %v219
    %v238 = vunpack.c.l.b16 %v199
    %v239 = vunpack.c.l.b16 %v200
    %v240 = vunpack.c.l.b16 %v201
    %v241 = vunpack.c.l.b16 %v202
    %v242 = vunpack.c.l.b16 %v203
    %v243 = vunpack.c.l.b16 %v204
    %v244 = vunpack.c.l.b16 %v205
    %v245 = vunpack.c.l.b16 %v206
    %v246 = vunpack.c.l.b16 %v207
    %v247 = vunpack.c.l.b16 %v208
    %v248 = vunpack.c.l.b16 %v209
    %v249 = vunpack.c.l.b16 %v210
    %v250 = vunpack.c.l.b16 %v211
    %v251 = vunpack.c.l.b16 %v212
    %v252 = vunpack.c.l.b16 %v213
    %v253 = vunpack.c.l.b16 %v214
    %v254 = vpack.c.b16 %v239, %v238
    %v255 = vpack.c.b16 %v241, %v240
    %v256 = vpack.c.b16 %v243, %v242
    %v257 = vpack.c.b16 %v245, %v244
    %v258 = vpack.c.b16 %v247, %v246
    %v259 = vpack.c.b16 %v249, %v248
    %v260 = vpack.c.b16 %v251, %v250
    %v261 = vpack.c.b16 %v253, %v252
    %270 = vmatprep.subr.bf16.mxu0 0
    %271 = vmatpush1.bf16.msra.mxu0 %v254
    %272 = vmatprep.subr.bf16.mxu0 0
    %273 = vmatpush1.bf16.msra.mxu0 %v255
    %274 = vmatprep.subr.bf16.mxu0 0
    %275 = vmatpush1.bf16.msra.mxu0 %v256
    %276 = vmatprep.subr.bf16.mxu0 0
    %277 = vmatpush1.bf16.msra.mxu0 %v257
    %278 = vmatprep.subr.bf16.mxu0 0
    %279 = vmatpush1.bf16.msra.mxu0 %v258
    %280 = vmatprep.subr.bf16.mxu0 0
    %281 = vmatpush1.bf16.msra.mxu0 %v259
    %282 = vmatprep.subr.bf16.mxu0 0
    %283 = vmatpush1.bf16.msra.mxu0 %v260
    %284 = vmatprep.subr.bf16.mxu0 0
    %285 = vmatpush1.bf16.msra.mxu0 %v261
    %286 = vmatprep.subr.bf16.mxu0 0
    %287 = vmatpush1.bf16.msra.mxu0 0
    %288 = vmatprep.subr.bf16.mxu0 0
    %289 = vmatpush1.bf16.msra.mxu0 0
    %290 = vmatprep.subr.bf16.mxu0 0
    %291 = vmatpush1.bf16.msra.mxu0 0
    %292 = vmatprep.subr.bf16.mxu0 0
    %293 = vmatpush1.bf16.msra.mxu0 0
    %294 = vmatprep.subr.bf16.mxu0 0
    %295 = vmatpush1.bf16.msra.mxu0 0
    %296 = vmatprep.subr.bf16.mxu0 0
    %297 = vmatpush1.bf16.msra.mxu0 0
    %298 = vmatprep.subr.bf16.mxu0 0
    %299 = vmatpush1.bf16.msra.mxu0 0
    %300 = vmatprep.subr.bf16.mxu0 0
    %301 = vmatpush1.bf16.msra.mxu0 0
    %302 = vmatprep.mubr.bf16.mxu0 0
    %303 = vmatmul.mubr.bf16.gmra.mrb[0].mxu0 %v191
    %v304 = vpop.f32.mrb[0].mxu0
    %v305 = vadd.f32 %v220, %v304
    %v306 = vpop.f32.mrb[0].mxu0
    %v307 = vpop.f32.mrb[0].mxu0
    %v308 = vadd.f32 %v220, %v307
    %v309 = vpop.f32.mrb[0].mxu0
    %310 = vmatprep.mubr.bf16.mxu0 0
    %311 = vmatmul.mubr.bf16.gmra.mrb[0].mxu0 %v192
    %v312 = vpop.f32.mrb[0].mxu0
    %v313 = vadd.f32 %v220, %v312
    %v314 = vpop.f32.mrb[0].mxu0
    %v315 = vpop.f32.mrb[0].mxu0
    %v316 = vadd.f32 %v220, %v315
    %v317 = vpop.f32.mrb[0].mxu0
    %318 = vmatprep.mubr.bf16.mxu0 0
    %319 = vmatmul.mubr.bf16.gmra.mrb[0].mxu0 %v193
    %v320 = vpop.f32.mrb[0].mxu0
    %v321 = vadd.f32 %v220, %v320
    %v322 = vpop.f32.mrb[0].mxu0
    %v323 = vpop.f32.mrb[0].mxu0
    %v324 = vadd.f32 %v220, %v323
    %v325 = vpop.f32.mrb[0].mxu0
    %326 = vmatprep.mubr.bf16.mxu0 0
    %327 = vmatmul.mubr.bf16.gmra.mrb[0].mxu0 %v194
    %v328 = vpop.f32.mrb[0].mxu0
    %v329 = vadd.f32 %v220, %v328
    %v330 = vpop.f32.mrb[0].mxu0
    %v331 = vpop.f32.mrb[0].mxu0
    %v332 = vadd.f32 %v220, %v331
    %v333 = vpop.f32.mrb[0].mxu0
    %334 = vmatprep.mubr.bf16.mxu0 0
    %335 = vmatmul.mubr.bf16.gmra.mrb[0].mxu0 %v195
    %v336 = vpop.f32.mrb[0].mxu0
    %v337 = vadd.f32 %v220, %v336
    %v338 = vpop.f32.mrb[0].mxu0
    %v339 = vpop.f32.mrb[0].mxu0
    %v340 = vadd.f32 %v220, %v339
    %v341 = vpop.f32.mrb[0].mxu0
    %342 = vmatprep.mubr.bf16.mxu0 0
    %343 = vmatmul.mubr.bf16.gmra.mrb[0].mxu0 %v196
    %v344 = vpop.f32.mrb[0].mxu0
    %v345 = vadd.f32 %v220, %v344
    %v346 = vpop.f32.mrb[0].mxu0
    %v347 = vpop.f32.mrb[0].mxu0
    %v348 = vadd.f32 %v220, %v347
    %v349 = vpop.f32.mrb[0].mxu0
    %350 = vmatprep.mubr.bf16.mxu0 0
    %351 = vmatmul.mubr.bf16.gmra.mrb[0].mxu0 %v197
    %v352 = vpop.f32.mrb[0].mxu0
    %v353 = vadd.f32 %v220, %v352
    %v354 = vpop.f32.mrb[0].mxu0
    %v355 = vpop.f32.mrb[0].mxu0
    %v356 = vadd.f32 %v220, %v355
    %v357 = vpop.f32.mrb[0].mxu0
    %358 = vmatprep.mubr.bf16.mxu0 0
    %359 = vmatmul.mubr.bf16.gmra.mrb[0].mxu0 %v198
    %v360 = vpop.f32.mrb[0].mxu0
    %v361 = vadd.f32 %v220, %v360
    %v362 = vpop.f32.mrb[0].mxu0
    %v363 = vpop.f32.mrb[0].mxu0
    %v364 = vadd.f32 %v220, %v363
    %v365 = vpop.f32.mrb[0].mxu0
    %366 = vdwg.mxu0
    %v367 = vld [vmem:[#allocation11] sm:$0x1]
    %v369 = vlaneseq
    %v370 = vshrl.u32 %v369, 7
    %v371 = vsub.s32 0, %v370
    %v372 = vrot.slane %v367, %v371
    %v374 = vmul.f32 %v305, %v372
    %v375 = vmul.f32 %v308, %v372
    %v376 = vmul.f32 %v313, %v372
    %v377 = vmul.f32 %v316, %v372
    %v378 = vmul.f32 %v321, %v372
    %v379 = vmul.f32 %v324, %v372
    %v380 = vmul.f32 %v329, %v372
    %v381 = vmul.f32 %v332, %v372
    %v382 = vmul.f32 %v337, %v372
    %v383 = vmul.f32 %v340, %v372
    %v384 = vmul.f32 %v345, %v372
    %v385 = vmul.f32 %v348, %v372
    %v386 = vmul.f32 %v353, %v372
    %v387 = vmul.f32 %v356, %v372
    %v388 = vmul.f32 %v361, %v372
    %v389 = vmul.f32 %v364, %v372
    %v390 = vld [vmem:[#allocation13] sm:$0x1]
    %v392 = vlaneseq
    %v393 = vshrl.u32 %v392, 7
    %v394 = vsub.s32 0, %v393
    %v395 = vrot.slane %v390, %v394
    %v397 = vadd.f32 %v374, %v395
    %v398 = vadd.f32 %v375, %v395
    %v399 = vadd.f32 %v376, %v395
    %v400 = vadd.f32 %v377, %v395
    %v401 = vadd.f32 %v378, %v395
    %v402 = vadd.f32 %v379, %v395
    %v403 = vadd.f32 %v380, %v395
    %v404 = vadd.f32 %v381, %v395
    %v405 = vadd.f32 %v382, %v395
    %v406 = vadd.f32 %v383, %v395
    %v407 = vadd.f32 %v384, %v395
    %v408 = vadd.f32 %v385, %v395
    %v409 = vadd.f32 %v386, %v395
    %v410 = vadd.f32 %v387, %v395
    %v411 = vadd.f32 %v388, %v395
    %v412 = vadd.f32 %v389, %v395
    %v413 = vmax.f32 %v397, 0.0
    %v414 = vmax.f32 %v398, 0.0
    %v415 = vmax.f32 %v399, 0.0
    %v416 = vmax.f32 %v400, 0.0
    %v417 = vmax.f32 %v401, 0.0
    %v418 = vmax.f32 %v402, 0.0
    %v419 = vmax.f32 %v403, 0.0
    %v420 = vmax.f32 %v404, 0.0
    %v421 = vmax.f32 %v405, 0.0
    %v422 = vmax.f32 %v406, 0.0
    %v423 = vmax.f32 %v407, 0.0
    %v424 = vmax.f32 %v408, 0.0
    %v425 = vmax.f32 %v409, 0.0
    %v426 = vmax.f32 %v410, 0.0
    %v427 = vmax.f32 %v411, 0.0
    %v428 = vmax.f32 %v412, 0.0
    %429 = vst [vmem:[#allocation14] sm:$0xff] %v413
    %430 = vst [vmem:[#allocation14 + $0x8] sm:$0xff] %v414
    %431 = vst [vmem:[#allocation14 + $0x10] sm:$0xff] %v415
    %432 = vst [vmem:[#allocation14 + $0x18] sm:$0xff] %v416
    %433 = vst [vmem:[#allocation14 + $0x20] sm:$0xff] %v417
    %434 = vst [vmem:[#allocation14 + $0x28] sm:$0xff] %v418
    %435 = vst [vmem:[#allocation14 + $0x30] sm:$0xff] %v419
    %436 = vst [vmem:[#allocation14 + $0x38] sm:$0xff] %v420
    %437 = vst [vmem:[#allocation14 + $0x40] sm:$0xff] %v421
    %438 = vst [vmem:[#allocation14 + $0x48] sm:$0xff] %v422
    %439 = vst [vmem:[#allocation14 + $0x50] sm:$0xff] %v423
    %440 = vst [vmem:[#allocation14 + $0x58] sm:$0xff] %v424
    %441 = vst [vmem:[#allocation14 + $0x60] sm:$0xff] %v425
    %442 = vst [vmem:[#allocation14 + $0x68] sm:$0xff] %v426
    %443 = vst [vmem:[#allocation14 + $0x70] sm:$0xff] %v427
    %444 = vst [vmem:[#allocation14 + $0x78] sm:$0xff] %v428
    // Predicated region
    $region58: #{tpu_custom_call.1} parent=1 // pred_check
      _
    $region59: #{tpu_custom_call.1} parent=1 // pred_check_branch
      %446 = sbr.rel (0) target = $region61
    $region60: #{tpu_custom_call.1} parent=1 // pred_region
      %s448 = ssub.s32 2048, 2048
      %449 = vsyncadd [#allocation4], %s448
      %s450 = sshll.u32 [#allocation14], 4
      %s451 = int_to_ptr.vmem [resolvable:$true] %s450
      %456 = dma.vmem_to_hbm [thread:$0]  %s451, 2048, %s7, [#allocation4], 128, 128, 8
    $region61: #{tpu_custom_call.1} parent=1 // pred_fallthru
      _
    // Predicated region
    $region62: #{tpu_custom_call.1} parent=1 // pred_check
      _
    $region63: #{tpu_custom_call.1} parent=1 // pred_check_branch
      %458 = sbr.rel (0) target = $region65
    $region64: #{tpu_custom_call.1} parent=1 // pred_region
      %459 = dma.done [#allocation4], 2048
    $region65: #{tpu_custom_call.1} parent=1 // pred_fallthru
      _
    %460 = vsyncpa [#allocation3], 1
    %461 = vsyncpa [#allocation6], 1
    %462 = vsyncpa [#allocation9], 1
    %463 = vsyncpa [#allocation12], 1
    %464 = vsyncpa [#allocation4], 1

</llo_original>
